<compile_context>
chip_gen: v5e
topology: v5e:2x2
jax: 0.10.0
libtpu: 0.0.40
codegen_flags: <defaults>
</compile_context>

<pallas_src>
import functools

import jax
import jax.numpy as jnp
import numpy as np
from jax import lax
from jax.experimental import pallas as pl
from jax.experimental.pallas import tpu as pltpu

VMEM_SPEC = pl.BlockSpec(memory_space=pltpu.MemorySpace.VMEM)


# ------------------------------------------------------------------
# Fused Listener kernel (feature embed + GRU encoder + bilinear compare)
# ------------------------------------------------------------------
def listener_kernel(tok_len_ref, feats_ref, gru_w_ref, fw_ref, bias_ref, o_ref,
                    *, B, T, n_obj, V, H, F, feat_dim):
    f32 = jnp.float32
    TB = T * B

    # ---- unpack the packed operand blocks (static slices, done once) -------
    tok_len = tok_len_ref[...]                     # (T*B + B, 1) int32
    ids = tok_len[:TB, :]                          # (TB, 1) time-major token ids
    lens = tok_len[TB:, :]                         # (B, 1)  valid lengths

    gru_w = gru_w_ref[...]                         # (V + H, 3H)
    gi_tbl = gru_w[:V, :]                          # (V, 3H) = emb_tbl @ W_ih^T + [b_ir+b_hr | b_iz+b_hz | b_in]
    whh = gru_w[V:, :]                             # (H, 3H) = W_hh^T (gate order r|z|n)

    fw = fw_ref[...]                               # (feat_dim + H, F)
    w_feat_t = fw[:feat_dim, :]                    # (feat_dim, F)
    w_bil_t = fw[feat_dim:, :]                     # (H, F)

    biases = bias_ref[...]                         # (1, H + F)
    bhh_n = biases[:, :H]                          # (1, H)   b_hn (stays inside r*(.))
    b_feat = biases[:, H:]                         # (1, F)

    # ---- feature path: ReLU(feats @ W_feat^T + b) ---------------------------
    femb = jnp.maximum(
        jnp.dot(feats_ref[...], w_feat_t, preferred_element_type=f32) + b_feat,
        0.0)                                       # (B*n_obj, F)
    # TODO(synk): nn.Dropout(p=0.2) omitted (eval-mode identity).

    # ---- embedding gather + input gate projection fused into ONE matmul ----
    # one-hot rows sum to 1, so the input-side biases folded into gi_tbl come
    # through exactly for every in-range token id.
    onehot = (ids == lax.broadcasted_iota(jnp.int32, (TB, V), 1)).astype(f32)
    gi_all = jnp.dot(onehot, gi_tbl, preferred_element_type=f32)   # (TB, 3H)

    # ---- GRU recurrence: ONE fused (B,H)x(H,3H) matmul per step -------------
    # T is small & static -> Python unroll; switch to lax.fori_loop(unroll=True)
    # if T grows enough for vreg pressure to matter.
    h = jnp.zeros((B, H), f32)
    for t in range(T):
        gi = gi_all[t * B:(t + 1) * B, :]                           # (B, 3H)
        gh = jnp.dot(h, whh, preferred_element_type=f32)            # (B, 3H)
        r = jax.nn.sigmoid(gi[:, :H] + gh[:, :H])
        z = jax.nn.sigmoid(gi[:, H:2 * H] + gh[:, H:2 * H])
        n = jnp.tanh(gi[:, 2 * H:] + r * (gh[:, 2 * H:] + bhh_n))
        h_new = (1.0 - z) * n + z * h
        # pack_padded_sequence semantics: freeze hidden past lang_length
        h = jnp.where(lens > t, h_new, h)

    # ---- bilinear projection + compare, lane-dense (B, n_obj) output --------
    lb = jnp.dot(h, w_bil_t, preferred_element_type=f32)            # (B, F)
    # one matmul against ALL object rows (replaces sel-matmul + @ones(F,1));
    # keep only the block-diagonal (objects belonging to batch b).  All 2-D ops.
    scores_all = jnp.dot(lb, femb.T, preferred_element_type=f32)    # (B, B*n_obj)
    o_ref[...] = jnp.concatenate(
        [scores_all[b:b + 1, b * n_obj:(b + 1) * n_obj] for b in range(B)],
        axis=0)                                                     # (B, n_obj)


# ------------------------------------------------------------------
# Wrapper: trace-time weight re-layout (embedding/W_ih/bias folding,
# gate concat, operand packing) + single fused grid-less pallas_call.
# ------------------------------------------------------------------
def listener_forward(params, feats, lang, lang_length):
    B, n_obj, feat_dim = feats.shape
    T = lang.shape[1]
    H = params["w_hh"].shape[1]
    F = params["w_bil"].shape[0]
    V = params["emb_table"].shape[0]
    hp = lax.Precision.HIGHEST

    # --- runtime tensors (2 small DMAs) ---
    feats_flat = feats.reshape(B * n_obj, feat_dim)
    lang_tb = lang.T.reshape(T * B).astype(jnp.int32)      # time-major: row t*B+b = lang[b,t]
    tok_len = jnp.concatenate(
        [lang_tb, lang_length.astype(jnp.int32)]).reshape(T * B + B, 1)

    # --- parameter-only re-layout (cacheable per checkpoint; 3 DMAs) ---
    w_ih, w_hh = params["w_ih"], params["w_hh"]            # (3H,E), (3H,H), gate order r|z|n
    b_ih = params["b_ih"].reshape(-1)                      # (3H,)
    b_hh = params["b_hh"].reshape(-1)                      # (3H,)
    gi_bias = jnp.concatenate([b_ih[:2 * H] + b_hh[:2 * H],   # r,z: hidden bias folds into gi side
                               b_ih[2 * H:3 * H]])             # n : only input bias here
    gi_table = jnp.dot(params["emb_table"], w_ih.T, precision=hp) + gi_bias[None, :]  # (V, 3H)
    gru_w = jnp.concatenate([gi_table, w_hh.T], axis=0)                               # (V+H, 3H)
    fw = jnp.concatenate([params["w_feat"].T, params["w_bil"].T], axis=0)             # (feat_dim+H, F)
    biases = jnp.concatenate([b_hh[2 * H:3 * H].reshape(1, H),
                              params["b_feat"].reshape(1, F)], axis=1)                # (1, H+F)

    kernel = functools.partial(listener_kernel, B=B, T=T, n_obj=n_obj,
                               V=V, H=H, F=F, feat_dim=feat_dim)

    # NOTE(v7x): grid-less single call — every operand is a few KiB, so VMEM is a
    # non-issue on all generations.  If B*n_obj or V grows: (a) add a
    # ("parallel",) grid over the BN axis of the feats/compare path for the two
    # v7x TensorCores, (b) keep the embedding table in HBM (memory_space=pl.ANY)
    # and gather rows via scalar-prefetched token ids + make_async_copy instead
    # of the one-hot matmul, and (c) set
    # pltpu.CompilerParams(vmem_limit_bytes=...) for the 64 MiB v7x budget.
    return pl.pallas_call(
        kernel,
        out_shape=jax.ShapeDtypeStruct((B, n_obj), jnp.float32),
        in_specs=[VMEM_SPEC] * 5,
        out_specs=VMEM_SPEC,
    )(tok_len, feats_flat, gru_w, fw, biases)


# ------------------------------------------------------------------
# Pure-JAX reference (sanity check)
# ------------------------------------------------------------------
def listener_reference(params, feats, lang, lang_length):
    B, n_obj, feat_dim = feats.shape
    hp = jax.lax.Precision.HIGHEST
    fe = jnp.maximum(
        jnp.einsum("nd,fd->nf", feats.reshape(B * n_obj, feat_dim),
                   params["w_feat"], precision=hp) + params["b_feat"], 0.0
    ).reshape(B, n_obj, -1)

    emb_seq = params["emb_table"][lang]              # (B, T, E)
    H = params["w_hh"].shape[1]

    def step(h, inp):
        x_t, t = inp
        gi = jnp.einsum("be,ge->bg", x_t, params["w_ih"], precision=hp) + params["b_ih"]
        gh = jnp.einsum("bh,gh->bg", h, params["w_hh"], precision=hp) + params["b_hh"]
        i_r, i_z, i_n = gi[:, :H], gi[:, H:2 * H], gi[:, 2 * H:]
        h_r, h_z, h_n = gh[:, :H], gh[:, H:2 * H], gh[:, 2 * H:]
        r = jax.nn.sigmoid(i_r + h_r)
        z = jax.nn.sigmoid(i_z + h_z)
        n = jnp.tanh(i_n + r * h_n)
        h_new = (1.0 - z) * n + z * h
        mask = (t < lang_length)[:, None].astype(jnp.float32)
        return mask * h_new + (1.0 - mask) * h, None

    T = lang.shape[1]
    h_final, _ = lax.scan(step, jnp.zeros((B, H), jnp.float32),
                          (jnp.transpose(emb_seq, (1, 0, 2)), jnp.arange(T)))
    lb = jnp.einsum("bm,fm->bf", h_final, params["w_bil"], precision=hp)
    return jnp.einsum("bjh,bh->bj", fe, lb, precision=hp)


if __name__ == "__main__":
    # ---- sizes ----
    B, n_obj = 2, 4
    feat_dim, feat_size = 64, 32          # feat_model.final_feat_dim = 32
    message_size = 32                     # GRU hidden size == message_size
    vocab_size, embed_dim, T = 16, 16, 8

    key = jax.random.PRNGKey(0)
    ks = jax.random.split(key, 12)

    params = {
        # feat_model ~ Linear(feat_dim, feat_size) + ReLU
        "w_feat": jax.random.normal(ks[0], (feat_size, feat_dim), jnp.float32) * 0.1,
        "b_feat": jax.random.normal(ks[1], (1, feat_size), jnp.float32) * 0.1,
        # embedding_module: nn.Embedding(vocab_size, embed_dim)
        "emb_table": jax.random.normal(ks[2], (vocab_size, embed_dim), jnp.float32) * 0.5,
        # RNNEncoder GRU (PyTorch gate order r, z, n)
        "w_ih": jax.random.normal(ks[3], (3 * message_size, embed_dim), jnp.float32) * 0.1,
        "w_hh": jax.random.normal(ks[4], (3 * message_size, message_size), jnp.float32) * 0.1,
        "b_ih": jax.random.normal(ks[5], (1, 3 * message_size), jnp.float32) * 0.1,
        "b_hh": jax.random.normal(ks[6], (1, 3 * message_size), jnp.float32) * 0.1,
        # bilinear: nn.Linear(message_size, feat_size, bias=False)
        "w_bil": jax.random.normal(ks[7], (feat_size, message_size), jnp.float32) * 0.1,
    }

    feats = jax.random.normal(ks[8], (B, n_obj, feat_dim), jnp.float32)
    lang = jax.random.randint(ks[9], (B, T), 0, vocab_size, jnp.int32)
    lang_length = jnp.array([5, 8], jnp.int32)

    fwd = jax.jit(listener_forward)
    scores = fwd(params, feats, lang, lang_length)
    scores = jax.block_until_ready(scores)

    ref = listener_reference(params, feats, lang, lang_length)
    np.testing.assert_allclose(np.asarray(scores), np.asarray(ref),
                               rtol=1e-3, atol=1e-3)
    assert scores.shape == (B, n_obj)

    print("KERNEL_OK")
</pallas_src>

<mosaic_0001>
module attributes {stable_mosaic.version = 11 : i64} {
  func.func @listener_kernel(%arg0: memref<18x1xi32, #tpu.memory_space<vmem>>, %arg1: memref<8x64xf32, #tpu.memory_space<vmem>>, %arg2: memref<48x96xf32, #tpu.memory_space<vmem>>, %arg3: memref<96x32xf32, #tpu.memory_space<vmem>>, %arg4: memref<1x64xf32, #tpu.memory_space<vmem>>, %arg5: memref<2x4xf32, #tpu.memory_space<vmem>>) attributes {dimension_semantics = [], scalar_prefetch = 0 : i64, scratch_operands = 0 : i64, tpu.core_type = #tpu.core_type<tc>} {
    %c0 = arith.constant 0 : index
    %c0_0 = arith.constant 0 : index
    %0 = vector.load %arg0[%c0, %c0_0] : memref<18x1xi32, #tpu.memory_space<vmem>>, vector<18x1xi32>
    %1 = vector.extract_strided_slice %0 {offsets = [0, 0], sizes = [16, 1], strides = [1, 1]} : vector<18x1xi32> to vector<16x1xi32>
    %2 = vector.extract_strided_slice %0 {offsets = [16, 0], sizes = [2, 1], strides = [1, 1]} : vector<18x1xi32> to vector<2x1xi32>
    %c0_1 = arith.constant 0 : index
    %c0_2 = arith.constant 0 : index
    %3 = vector.load %arg2[%c0_1, %c0_2] : memref<48x96xf32, #tpu.memory_space<vmem>>, vector<48x96xf32>
    %4 = vector.extract_strided_slice %3 {offsets = [0, 0], sizes = [16, 96], strides = [1, 1]} : vector<48x96xf32> to vector<16x96xf32>
    %5 = vector.extract_strided_slice %3 {offsets = [16, 0], sizes = [32, 96], strides = [1, 1]} : vector<48x96xf32> to vector<32x96xf32>
    %c0_3 = arith.constant 0 : index
    %c0_4 = arith.constant 0 : index
    %6 = vector.load %arg3[%c0_3, %c0_4] : memref<96x32xf32, #tpu.memory_space<vmem>>, vector<96x32xf32>
    %7 = vector.extract_strided_slice %6 {offsets = [0, 0], sizes = [64, 32], strides = [1, 1]} : vector<96x32xf32> to vector<64x32xf32>
    %8 = vector.extract_strided_slice %6 {offsets = [64, 0], sizes = [32, 32], strides = [1, 1]} : vector<96x32xf32> to vector<32x32xf32>
    %c0_5 = arith.constant 0 : index
    %c0_6 = arith.constant 0 : index
    %9 = vector.load %arg4[%c0_5, %c0_6] : memref<1x64xf32, #tpu.memory_space<vmem>>, vector<1x64xf32>
    %10 = vector.extract_strided_slice %9 {offsets = [0, 0], sizes = [1, 32], strides = [1, 1]} : vector<1x64xf32> to vector<1x32xf32>
    %11 = vector.extract_strided_slice %9 {offsets = [0, 32], sizes = [1, 32], strides = [1, 1]} : vector<1x64xf32> to vector<1x32xf32>
    %c0_7 = arith.constant 0 : index
    %c0_8 = arith.constant 0 : index
    %12 = vector.load %arg1[%c0_7, %c0_8] : memref<8x64xf32, #tpu.memory_space<vmem>>, vector<8x64xf32>
    %cst = arith.constant dense<0.000000e+00> : vector<8x32xf32>
    %13 = tpu.matmul %12, %7, %cst {dimension_numbers = #tpu.dot_dimension_numbers<[1], [0], [0], [1], [0, 0, 1, 1], [], []>} : vector<8x64xf32>, vector<64x32xf32>, vector<8x32xf32> -> vector<8x32xf32>
    %14 = vector.broadcast %11 : vector<1x32xf32> to vector<8x32xf32>
    %15 = arith.addf %13, %14 : vector<8x32xf32>
    %cst_9 = arith.constant 0.000000e+00 : f32
    %16 = vector.broadcast %cst_9 : f32 to vector<8x32xf32>
    %17 = arith.maximumf %15, %16 : vector<8x32xf32>
    %18 = tpu.iota {dimensions = array<i32: 1>} : vector<16x16xi32>
    %19 = vector.broadcast %1 : vector<16x1xi32> to vector<16x16xi32>
    %20 = arith.cmpi eq, %19, %18 : vector<16x16xi32>
    %21 = arith.extui %20 : vector<16x16xi1> to vector<16x16xi32>
    %22 = arith.sitofp %21 : vector<16x16xi32> to vector<16x16xf32>
    %cst_10 = arith.constant dense<0.000000e+00> : vector<16x96xf32>
    %23 = tpu.matmul %22, %4, %cst_10 {dimension_numbers = #tpu.dot_dimension_numbers<[1], [0], [0], [1], [0, 0, 1, 1], [], []>} : vector<16x16xf32>, vector<16x96xf32>, vector<16x96xf32> -> vector<16x96xf32>
    %cst_11 = arith.constant 0.000000e+00 : f32
    %24 = vector.broadcast %cst_11 : f32 to vector<2x32xf32>
    %25 = vector.extract_strided_slice %23 {offsets = [0, 0], sizes = [2, 96], strides = [1, 1]} : vector<16x96xf32> to vector<2x96xf32>
    %cst_12 = arith.constant dense<0.000000e+00> : vector<2x96xf32>
    %26 = tpu.matmul %24, %5, %cst_12 {dimension_numbers = #tpu.dot_dimension_numbers<[1], [0], [0], [1], [0, 0, 1, 1], [], []>} : vector<2x32xf32>, vector<32x96xf32>, vector<2x96xf32> -> vector<2x96xf32>
    %27 = vector.extract_strided_slice %25 {offsets = [0, 0], sizes = [2, 32], strides = [1, 1]} : vector<2x96xf32> to vector<2x32xf32>
    %28 = vector.extract_strided_slice %26 {offsets = [0, 0], sizes = [2, 32], strides = [1, 1]} : vector<2x96xf32> to vector<2x32xf32>
    %29 = arith.addf %27, %28 : vector<2x32xf32>
    %30 = arith.negf %29 : vector<2x32xf32>
    %31 = math.exp %30 : vector<2x32xf32>
    %cst_13 = arith.constant 1.000000e+00 : f32
    %32 = vector.broadcast %cst_13 : f32 to vector<2x32xf32>
    %33 = arith.addf %32, %31 : vector<2x32xf32>
    %34 = arith.divf %32, %33 : vector<2x32xf32>
    %35 = vector.extract_strided_slice %25 {offsets = [0, 32], sizes = [2, 32], strides = [1, 1]} : vector<2x96xf32> to vector<2x32xf32>
    %36 = vector.extract_strided_slice %26 {offsets = [0, 32], sizes = [2, 32], strides = [1, 1]} : vector<2x96xf32> to vector<2x32xf32>
    %37 = arith.addf %35, %36 : vector<2x32xf32>
    %38 = arith.negf %37 : vector<2x32xf32>
    %39 = math.exp %38 : vector<2x32xf32>
    %cst_14 = arith.constant 1.000000e+00 : f32
    %40 = vector.broadcast %cst_14 : f32 to vector<2x32xf32>
    %41 = arith.addf %40, %39 : vector<2x32xf32>
    %42 = arith.divf %40, %41 : vector<2x32xf32>
    %43 = vector.extract_strided_slice %25 {offsets = [0, 64], sizes = [2, 32], strides = [1, 1]} : vector<2x96xf32> to vector<2x32xf32>
    %44 = vector.extract_strided_slice %26 {offsets = [0, 64], sizes = [2, 32], strides = [1, 1]} : vector<2x96xf32> to vector<2x32xf32>
    %45 = vector.broadcast %10 : vector<1x32xf32> to vector<2x32xf32>
    %46 = arith.addf %44, %45 : vector<2x32xf32>
    %47 = arith.mulf %34, %46 : vector<2x32xf32>
    %48 = arith.addf %43, %47 : vector<2x32xf32>
    %49 = math.tanh %48 : vector<2x32xf32>
    %cst_15 = arith.constant 1.000000e+00 : f32
    %50 = vector.broadcast %cst_15 : f32 to vector<2x32xf32>
    %51 = arith.subf %50, %42 : vector<2x32xf32>
    %52 = arith.mulf %51, %49 : vector<2x32xf32>
    %53 = arith.mulf %42, %24 : vector<2x32xf32>
    %54 = arith.addf %52, %53 : vector<2x32xf32>
    %c0_i32 = arith.constant 0 : i32
    %55 = vector.broadcast %c0_i32 : i32 to vector<2x1xi32>
    %56 = arith.cmpi sgt, %2, %55 : vector<2x1xi32>
    %57 = vector.shape_cast %56 : vector<2x1xi1> to vector<2x1xi1>
    %58 = vector.broadcast %57 : vector<2x1xi1> to vector<2x32xi1>
    %59 = arith.select %58, %54, %24 : vector<2x32xi1>, vector<2x32xf32>
    %60 = vector.extract_strided_slice %23 {offsets = [2, 0], sizes = [2, 96], strides = [1, 1]} : vector<16x96xf32> to vector<2x96xf32>
    %cst_16 = arith.constant dense<0.000000e+00> : vector<2x96xf32>
    %61 = tpu.matmul %59, %5, %cst_16 {dimension_numbers = #tpu.dot_dimension_numbers<[1], [0], [0], [1], [0, 0, 1, 1], [], []>} : vector<2x32xf32>, vector<32x96xf32>, vector<2x96xf32> -> vector<2x96xf32>
    %62 = vector.extract_strided_slice %60 {offsets = [0, 0], sizes = [2, 32], strides = [1, 1]} : vector<2x96xf32> to vector<2x32xf32>
    %63 = vector.extract_strided_slice %61 {offsets = [0, 0], sizes = [2, 32], strides = [1, 1]} : vector<2x96xf32> to vector<2x32xf32>
    %64 = arith.addf %62, %63 : vector<2x32xf32>
    %65 = arith.negf %64 : vector<2x32xf32>
    %66 = math.exp %65 : vector<2x32xf32>
    %cst_17 = arith.constant 1.000000e+00 : f32
    %67 = vector.broadcast %cst_17 : f32 to vector<2x32xf32>
    %68 = arith.addf %67, %66 : vector<2x32xf32>
    %69 = arith.divf %67, %68 : vector<2x32xf32>
    %70 = vector.extract_strided_slice %60 {offsets = [0, 32], sizes = [2, 32], strides = [1, 1]} : vector<2x96xf32> to vector<2x32xf32>
    %71 = vector.extract_strided_slice %61 {offsets = [0, 32], sizes = [2, 32], strides = [1, 1]} : vector<2x96xf32> to vector<2x32xf32>
    %72 = arith.addf %70, %71 : vector<2x32xf32>
    %73 = arith.negf %72 : vector<2x32xf32>
    %74 = math.exp %73 : vector<2x32xf32>
    %cst_18 = arith.constant 1.000000e+00 : f32
    %75 = vector.broadcast %cst_18 : f32 to vector<2x32xf32>
    %76 = arith.addf %75, %74 : vector<2x32xf32>
    %77 = arith.divf %75, %76 : vector<2x32xf32>
    %78 = vector.extract_strided_slice %60 {offsets = [0, 64], sizes = [2, 32], strides = [1, 1]} : vector<2x96xf32> to vector<2x32xf32>
    %79 = vector.extract_strided_slice %61 {offsets = [0, 64], sizes = [2, 32], strides = [1, 1]} : vector<2x96xf32> to vector<2x32xf32>
    %80 = vector.broadcast %10 : vector<1x32xf32> to vector<2x32xf32>
    %81 = arith.addf %79, %80 : vector<2x32xf32>
    %82 = arith.mulf %69, %81 : vector<2x32xf32>
    %83 = arith.addf %78, %82 : vector<2x32xf32>
    %84 = math.tanh %83 : vector<2x32xf32>
    %cst_19 = arith.constant 1.000000e+00 : f32
    %85 = vector.broadcast %cst_19 : f32 to vector<2x32xf32>
    %86 = arith.subf %85, %77 : vector<2x32xf32>
    %87 = arith.mulf %86, %84 : vector<2x32xf32>
    %88 = arith.mulf %77, %59 : vector<2x32xf32>
    %89 = arith.addf %87, %88 : vector<2x32xf32>
    %c1_i32 = arith.constant 1 : i32
    %90 = vector.broadcast %c1_i32 : i32 to vector<2x1xi32>
    %91 = arith.cmpi sgt, %2, %90 : vector<2x1xi32>
    %92 = vector.shape_cast %91 : vector<2x1xi1> to vector<2x1xi1>
    %93 = vector.broadcast %92 : vector<2x1xi1> to vector<2x32xi1>
    %94 = arith.select %93, %89, %59 : vector<2x32xi1>, vector<2x32xf32>
    %95 = vector.extract_strided_slice %23 {offsets = [4, 0], sizes = [2, 96], strides = [1, 1]} : vector<16x96xf32> to vector<2x96xf32>
    %cst_20 = arith.constant dense<0.000000e+00> : vector<2x96xf32>
    %96 = tpu.matmul %94, %5, %cst_20 {dimension_numbers = #tpu.dot_dimension_numbers<[1], [0], [0], [1], [0, 0, 1, 1], [], []>} : vector<2x32xf32>, vector<32x96xf32>, vector<2x96xf32> -> vector<2x96xf32>
    %97 = vector.extract_strided_slice %95 {offsets = [0, 0], sizes = [2, 32], strides = [1, 1]} : vector<2x96xf32> to vector<2x32xf32>
    %98 = vector.extract_strided_slice %96 {offsets = [0, 0], sizes = [2, 32], strides = [1, 1]} : vector<2x96xf32> to vector<2x32xf32>
    %99 = arith.addf %97, %98 : vector<2x32xf32>
    %100 = arith.negf %99 : vector<2x32xf32>
    %101 = math.exp %100 : vector<2x32xf32>
    %cst_21 = arith.constant 1.000000e+00 : f32
    %102 = vector.broadcast %cst_21 : f32 to vector<2x32xf32>
    %103 = arith.addf %102, %101 : vector<2x32xf32>
    %104 = arith.divf %102, %103 : vector<2x32xf32>
    %105 = vector.extract_strided_slice %95 {offsets = [0, 32], sizes = [2, 32], strides = [1, 1]} : vector<2x96xf32> to vector<2x32xf32>
    %106 = vector.extract_strided_slice %96 {offsets = [0, 32], sizes = [2, 32], strides = [1, 1]} : vector<2x96xf32> to vector<2x32xf32>
    %107 = arith.addf %105, %106 : vector<2x32xf32>
    %108 = arith.negf %107 : vector<2x32xf32>
    %109 = math.exp %108 : vector<2x32xf32>
    %cst_22 = arith.constant 1.000000e+00 : f32
    %110 = vector.broadcast %cst_22 : f32 to vector<2x32xf32>
    %111 = arith.addf %110, %109 : vector<2x32xf32>
    %112 = arith.divf %110, %111 : vector<2x32xf32>
    %113 = vector.extract_strided_slice %95 {offsets = [0, 64], sizes = [2, 32], strides = [1, 1]} : vector<2x96xf32> to vector<2x32xf32>
    %114 = vector.extract_strided_slice %96 {offsets = [0, 64], sizes = [2, 32], strides = [1, 1]} : vector<2x96xf32> to vector<2x32xf32>
    %115 = vector.broadcast %10 : vector<1x32xf32> to vector<2x32xf32>
    %116 = arith.addf %114, %115 : vector<2x32xf32>
    %117 = arith.mulf %104, %116 : vector<2x32xf32>
    %118 = arith.addf %113, %117 : vector<2x32xf32>
    %119 = math.tanh %118 : vector<2x32xf32>
    %cst_23 = arith.constant 1.000000e+00 : f32
    %120 = vector.broadcast %cst_23 : f32 to vector<2x32xf32>
    %121 = arith.subf %120, %112 : vector<2x32xf32>
    %122 = arith.mulf %121, %119 : vector<2x32xf32>
    %123 = arith.mulf %112, %94 : vector<2x32xf32>
    %124 = arith.addf %122, %123 : vector<2x32xf32>
    %c2_i32 = arith.constant 2 : i32
    %125 = vector.broadcast %c2_i32 : i32 to vector<2x1xi32>
    %126 = arith.cmpi sgt, %2, %125 : vector<2x1xi32>
    %127 = vector.shape_cast %126 : vector<2x1xi1> to vector<2x1xi1>
    %128 = vector.broadcast %127 : vector<2x1xi1> to vector<2x32xi1>
    %129 = arith.select %128, %124, %94 : vector<2x32xi1>, vector<2x32xf32>
    %130 = vector.extract_strided_slice %23 {offsets = [6, 0], sizes = [2, 96], strides = [1, 1]} : vector<16x96xf32> to vector<2x96xf32>
    %cst_24 = arith.constant dense<0.000000e+00> : vector<2x96xf32>
    %131 = tpu.matmul %129, %5, %cst_24 {dimension_numbers = #tpu.dot_dimension_numbers<[1], [0], [0], [1], [0, 0, 1, 1], [], []>} : vector<2x32xf32>, vector<32x96xf32>, vector<2x96xf32> -> vector<2x96xf32>
    %132 = vector.extract_strided_slice %130 {offsets = [0, 0], sizes = [2, 32], strides = [1, 1]} : vector<2x96xf32> to vector<2x32xf32>
    %133 = vector.extract_strided_slice %131 {offsets = [0, 0], sizes = [2, 32], strides = [1, 1]} : vector<2x96xf32> to vector<2x32xf32>
    %134 = arith.addf %132, %133 : vector<2x32xf32>
    %135 = arith.negf %134 : vector<2x32xf32>
    %136 = math.exp %135 : vector<2x32xf32>
    %cst_25 = arith.constant 1.000000e+00 : f32
    %137 = vector.broadcast %cst_25 : f32 to vector<2x32xf32>
    %138 = arith.addf %137, %136 : vector<2x32xf32>
    %139 = arith.divf %137, %138 : vector<2x32xf32>
    %140 = vector.extract_strided_slice %130 {offsets = [0, 32], sizes = [2, 32], strides = [1, 1]} : vector<2x96xf32> to vector<2x32xf32>
    %141 = vector.extract_strided_slice %131 {offsets = [0, 32], sizes = [2, 32], strides = [1, 1]} : vector<2x96xf32> to vector<2x32xf32>
    %142 = arith.addf %140, %141 : vector<2x32xf32>
    %143 = arith.negf %142 : vector<2x32xf32>
    %144 = math.exp %143 : vector<2x32xf32>
    %cst_26 = arith.constant 1.000000e+00 : f32
    %145 = vector.broadcast %cst_26 : f32 to vector<2x32xf32>
    %146 = arith.addf %145, %144 : vector<2x32xf32>
    %147 = arith.divf %145, %146 : vector<2x32xf32>
    %148 = vector.extract_strided_slice %130 {offsets = [0, 64], sizes = [2, 32], strides = [1, 1]} : vector<2x96xf32> to vector<2x32xf32>
    %149 = vector.extract_strided_slice %131 {offsets = [0, 64], sizes = [2, 32], strides = [1, 1]} : vector<2x96xf32> to vector<2x32xf32>
    %150 = vector.broadcast %10 : vector<1x32xf32> to vector<2x32xf32>
    %151 = arith.addf %149, %150 : vector<2x32xf32>
    %152 = arith.mulf %139, %151 : vector<2x32xf32>
    %153 = arith.addf %148, %152 : vector<2x32xf32>
    %154 = math.tanh %153 : vector<2x32xf32>
    %cst_27 = arith.constant 1.000000e+00 : f32
    %155 = vector.broadcast %cst_27 : f32 to vector<2x32xf32>
    %156 = arith.subf %155, %147 : vector<2x32xf32>
    %157 = arith.mulf %156, %154 : vector<2x32xf32>
    %158 = arith.mulf %147, %129 : vector<2x32xf32>
    %159 = arith.addf %157, %158 : vector<2x32xf32>
    %c3_i32 = arith.constant 3 : i32
    %160 = vector.broadcast %c3_i32 : i32 to vector<2x1xi32>
    %161 = arith.cmpi sgt, %2, %160 : vector<2x1xi32>
    %162 = vector.shape_cast %161 : vector<2x1xi1> to vector<2x1xi1>
    %163 = vector.broadcast %162 : vector<2x1xi1> to vector<2x32xi1>
    %164 = arith.select %163, %159, %129 : vector<2x32xi1>, vector<2x32xf32>
    %165 = vector.extract_strided_slice %23 {offsets = [8, 0], sizes = [2, 96], strides = [1, 1]} : vector<16x96xf32> to vector<2x96xf32>
    %cst_28 = arith.constant dense<0.000000e+00> : vector<2x96xf32>
    %166 = tpu.matmul %164, %5, %cst_28 {dimension_numbers = #tpu.dot_dimension_numbers<[1], [0], [0], [1], [0, 0, 1, 1], [], []>} : vector<2x32xf32>, vector<32x96xf32>, vector<2x96xf32> -> vector<2x96xf32>
    %167 = vector.extract_strided_slice %165 {offsets = [0, 0], sizes = [2, 32], strides = [1, 1]} : vector<2x96xf32> to vector<2x32xf32>
    %168 = vector.extract_strided_slice %166 {offsets = [0, 0], sizes = [2, 32], strides = [1, 1]} : vector<2x96xf32> to vector<2x32xf32>
    %169 = arith.addf %167, %168 : vector<2x32xf32>
    %170 = arith.negf %169 : vector<2x32xf32>
    %171 = math.exp %170 : vector<2x32xf32>
    %cst_29 = arith.constant 1.000000e+00 : f32
    %172 = vector.broadcast %cst_29 : f32 to vector<2x32xf32>
    %173 = arith.addf %172, %171 : vector<2x32xf32>
    %174 = arith.divf %172, %173 : vector<2x32xf32>
    %175 = vector.extract_strided_slice %165 {offsets = [0, 32], sizes = [2, 32], strides = [1, 1]} : vector<2x96xf32> to vector<2x32xf32>
    %176 = vector.extract_strided_slice %166 {offsets = [0, 32], sizes = [2, 32], strides = [1, 1]} : vector<2x96xf32> to vector<2x32xf32>
    %177 = arith.addf %175, %176 : vector<2x32xf32>
    %178 = arith.negf %177 : vector<2x32xf32>
    %179 = math.exp %178 : vector<2x32xf32>
    %cst_30 = arith.constant 1.000000e+00 : f32
    %180 = vector.broadcast %cst_30 : f32 to vector<2x32xf32>
    %181 = arith.addf %180, %179 : vector<2x32xf32>
    %182 = arith.divf %180, %181 : vector<2x32xf32>
    %183 = vector.extract_strided_slice %165 {offsets = [0, 64], sizes = [2, 32], strides = [1, 1]} : vector<2x96xf32> to vector<2x32xf32>
    %184 = vector.extract_strided_slice %166 {offsets = [0, 64], sizes = [2, 32], strides = [1, 1]} : vector<2x96xf32> to vector<2x32xf32>
    %185 = vector.broadcast %10 : vector<1x32xf32> to vector<2x32xf32>
    %186 = arith.addf %184, %185 : vector<2x32xf32>
    %187 = arith.mulf %174, %186 : vector<2x32xf32>
    %188 = arith.addf %183, %187 : vector<2x32xf32>
    %189 = math.tanh %188 : vector<2x32xf32>
    %cst_31 = arith.constant 1.000000e+00 : f32
    %190 = vector.broadcast %cst_31 : f32 to vector<2x32xf32>
    %191 = arith.subf %190, %182 : vector<2x32xf32>
    %192 = arith.mulf %191, %189 : vector<2x32xf32>
    %193 = arith.mulf %182, %164 : vector<2x32xf32>
    %194 = arith.addf %192, %193 : vector<2x32xf32>
    %c4_i32 = arith.constant 4 : i32
    %195 = vector.broadcast %c4_i32 : i32 to vector<2x1xi32>
    %196 = arith.cmpi sgt, %2, %195 : vector<2x1xi32>
    %197 = vector.shape_cast %196 : vector<2x1xi1> to vector<2x1xi1>
    %198 = vector.broadcast %197 : vector<2x1xi1> to vector<2x32xi1>
    %199 = arith.select %198, %194, %164 : vector<2x32xi1>, vector<2x32xf32>
    %200 = vector.extract_strided_slice %23 {offsets = [10, 0], sizes = [2, 96], strides = [1, 1]} : vector<16x96xf32> to vector<2x96xf32>
    %cst_32 = arith.constant dense<0.000000e+00> : vector<2x96xf32>
    %201 = tpu.matmul %199, %5, %cst_32 {dimension_numbers = #tpu.dot_dimension_numbers<[1], [0], [0], [1], [0, 0, 1, 1], [], []>} : vector<2x32xf32>, vector<32x96xf32>, vector<2x96xf32> -> vector<2x96xf32>
    %202 = vector.extract_strided_slice %200 {offsets = [0, 0], sizes = [2, 32], strides = [1, 1]} : vector<2x96xf32> to vector<2x32xf32>
    %203 = vector.extract_strided_slice %201 {offsets = [0, 0], sizes = [2, 32], strides = [1, 1]} : vector<2x96xf32> to vector<2x32xf32>
    %204 = arith.addf %202, %203 : vector<2x32xf32>
    %205 = arith.negf %204 : vector<2x32xf32>
    %206 = math.exp %205 : vector<2x32xf32>
    %cst_33 = arith.constant 1.000000e+00 : f32
    %207 = vector.broadcast %cst_33 : f32 to vector<2x32xf32>
    %208 = arith.addf %207, %206 : vector<2x32xf32>
    %209 = arith.divf %207, %208 : vector<2x32xf32>
    %210 = vector.extract_strided_slice %200 {offsets = [0, 32], sizes = [2, 32], strides = [1, 1]} : vector<2x96xf32> to vector<2x32xf32>
    %211 = vector.extract_strided_slice %201 {offsets = [0, 32], sizes = [2, 32], strides = [1, 1]} : vector<2x96xf32> to vector<2x32xf32>
    %212 = arith.addf %210, %211 : vector<2x32xf32>
    %213 = arith.negf %212 : vector<2x32xf32>
    %214 = math.exp %213 : vector<2x32xf32>
    %cst_34 = arith.constant 1.000000e+00 : f32
    %215 = vector.broadcast %cst_34 : f32 to vector<2x32xf32>
    %216 = arith.addf %215, %214 : vector<2x32xf32>
    %217 = arith.divf %215, %216 : vector<2x32xf32>
    %218 = vector.extract_strided_slice %200 {offsets = [0, 64], sizes = [2, 32], strides = [1, 1]} : vector<2x96xf32> to vector<2x32xf32>
    %219 = vector.extract_strided_slice %201 {offsets = [0, 64], sizes = [2, 32], strides = [1, 1]} : vector<2x96xf32> to vector<2x32xf32>
    %220 = vector.broadcast %10 : vector<1x32xf32> to vector<2x32xf32>
    %221 = arith.addf %219, %220 : vector<2x32xf32>
    %222 = arith.mulf %209, %221 : vector<2x32xf32>
    %223 = arith.addf %218, %222 : vector<2x32xf32>
    %224 = math.tanh %223 : vector<2x32xf32>
    %cst_35 = arith.constant 1.000000e+00 : f32
    %225 = vector.broadcast %cst_35 : f32 to vector<2x32xf32>
    %226 = arith.subf %225, %217 : vector<2x32xf32>
    %227 = arith.mulf %226, %224 : vector<2x32xf32>
    %228 = arith.mulf %217, %199 : vector<2x32xf32>
    %229 = arith.addf %227, %228 : vector<2x32xf32>
    %c5_i32 = arith.constant 5 : i32
    %230 = vector.broadcast %c5_i32 : i32 to vector<2x1xi32>
    %231 = arith.cmpi sgt, %2, %230 : vector<2x1xi32>
    %232 = vector.shape_cast %231 : vector<2x1xi1> to vector<2x1xi1>
    %233 = vector.broadcast %232 : vector<2x1xi1> to vector<2x32xi1>
    %234 = arith.select %233, %229, %199 : vector<2x32xi1>, vector<2x32xf32>
    %235 = vector.extract_strided_slice %23 {offsets = [12, 0], sizes = [2, 96], strides = [1, 1]} : vector<16x96xf32> to vector<2x96xf32>
    %cst_36 = arith.constant dense<0.000000e+00> : vector<2x96xf32>
    %236 = tpu.matmul %234, %5, %cst_36 {dimension_numbers = #tpu.dot_dimension_numbers<[1], [0], [0], [1], [0, 0, 1, 1], [], []>} : vector<2x32xf32>, vector<32x96xf32>, vector<2x96xf32> -> vector<2x96xf32>
    %237 = vector.extract_strided_slice %235 {offsets = [0, 0], sizes = [2, 32], strides = [1, 1]} : vector<2x96xf32> to vector<2x32xf32>
    %238 = vector.extract_strided_slice %236 {offsets = [0, 0], sizes = [2, 32], strides = [1, 1]} : vector<2x96xf32> to vector<2x32xf32>
    %239 = arith.addf %237, %238 : vector<2x32xf32>
    %240 = arith.negf %239 : vector<2x32xf32>
    %241 = math.exp %240 : vector<2x32xf32>
    %cst_37 = arith.constant 1.000000e+00 : f32
    %242 = vector.broadcast %cst_37 : f32 to vector<2x32xf32>
    %243 = arith.addf %242, %241 : vector<2x32xf32>
    %244 = arith.divf %242, %243 : vector<2x32xf32>
    %245 = vector.extract_strided_slice %235 {offsets = [0, 32], sizes = [2, 32], strides = [1, 1]} : vector<2x96xf32> to vector<2x32xf32>
    %246 = vector.extract_strided_slice %236 {offsets = [0, 32], sizes = [2, 32], strides = [1, 1]} : vector<2x96xf32> to vector<2x32xf32>
    %247 = arith.addf %245, %246 : vector<2x32xf32>
    %248 = arith.negf %247 : vector<2x32xf32>
    %249 = math.exp %248 : vector<2x32xf32>
    %cst_38 = arith.constant 1.000000e+00 : f32
    %250 = vector.broadcast %cst_38 : f32 to vector<2x32xf32>
    %251 = arith.addf %250, %249 : vector<2x32xf32>
    %252 = arith.divf %250, %251 : vector<2x32xf32>
    %253 = vector.extract_strided_slice %235 {offsets = [0, 64], sizes = [2, 32], strides = [1, 1]} : vector<2x96xf32> to vector<2x32xf32>
    %254 = vector.extract_strided_slice %236 {offsets = [0, 64], sizes = [2, 32], strides = [1, 1]} : vector<2x96xf32> to vector<2x32xf32>
    %255 = vector.broadcast %10 : vector<1x32xf32> to vector<2x32xf32>
    %256 = arith.addf %254, %255 : vector<2x32xf32>
    %257 = arith.mulf %244, %256 : vector<2x32xf32>
    %258 = arith.addf %253, %257 : vector<2x32xf32>
    %259 = math.tanh %258 : vector<2x32xf32>
    %cst_39 = arith.constant 1.000000e+00 : f32
    %260 = vector.broadcast %cst_39 : f32 to vector<2x32xf32>
    %261 = arith.subf %260, %252 : vector<2x32xf32>
    %262 = arith.mulf %261, %259 : vector<2x32xf32>
    %263 = arith.mulf %252, %234 : vector<2x32xf32>
    %264 = arith.addf %262, %263 : vector<2x32xf32>
    %c6_i32 = arith.constant 6 : i32
    %265 = vector.broadcast %c6_i32 : i32 to vector<2x1xi32>
    %266 = arith.cmpi sgt, %2, %265 : vector<2x1xi32>
    %267 = vector.shape_cast %266 : vector<2x1xi1> to vector<2x1xi1>
    %268 = vector.broadcast %267 : vector<2x1xi1> to vector<2x32xi1>
    %269 = arith.select %268, %264, %234 : vector<2x32xi1>, vector<2x32xf32>
    %270 = vector.extract_strided_slice %23 {offsets = [14, 0], sizes = [2, 96], strides = [1, 1]} : vector<16x96xf32> to vector<2x96xf32>
    %cst_40 = arith.constant dense<0.000000e+00> : vector<2x96xf32>
    %271 = tpu.matmul %269, %5, %cst_40 {dimension_numbers = #tpu.dot_dimension_numbers<[1], [0], [0], [1], [0, 0, 1, 1], [], []>} : vector<2x32xf32>, vector<32x96xf32>, vector<2x96xf32> -> vector<2x96xf32>
    %272 = vector.extract_strided_slice %270 {offsets = [0, 0], sizes = [2, 32], strides = [1, 1]} : vector<2x96xf32> to vector<2x32xf32>
    %273 = vector.extract_strided_slice %271 {offsets = [0, 0], sizes = [2, 32], strides = [1, 1]} : vector<2x96xf32> to vector<2x32xf32>
    %274 = arith.addf %272, %273 : vector<2x32xf32>
    %275 = arith.negf %274 : vector<2x32xf32>
    %276 = math.exp %275 : vector<2x32xf32>
    %cst_41 = arith.constant 1.000000e+00 : f32
    %277 = vector.broadcast %cst_41 : f32 to vector<2x32xf32>
    %278 = arith.addf %277, %276 : vector<2x32xf32>
    %279 = arith.divf %277, %278 : vector<2x32xf32>
    %280 = vector.extract_strided_slice %270 {offsets = [0, 32], sizes = [2, 32], strides = [1, 1]} : vector<2x96xf32> to vector<2x32xf32>
    %281 = vector.extract_strided_slice %271 {offsets = [0, 32], sizes = [2, 32], strides = [1, 1]} : vector<2x96xf32> to vector<2x32xf32>
    %282 = arith.addf %280, %281 : vector<2x32xf32>
    %283 = arith.negf %282 : vector<2x32xf32>
    %284 = math.exp %283 : vector<2x32xf32>
    %cst_42 = arith.constant 1.000000e+00 : f32
    %285 = vector.broadcast %cst_42 : f32 to vector<2x32xf32>
    %286 = arith.addf %285, %284 : vector<2x32xf32>
    %287 = arith.divf %285, %286 : vector<2x32xf32>
    %288 = vector.extract_strided_slice %270 {offsets = [0, 64], sizes = [2, 32], strides = [1, 1]} : vector<2x96xf32> to vector<2x32xf32>
    %289 = vector.extract_strided_slice %271 {offsets = [0, 64], sizes = [2, 32], strides = [1, 1]} : vector<2x96xf32> to vector<2x32xf32>
    %290 = vector.broadcast %10 : vector<1x32xf32> to vector<2x32xf32>
    %291 = arith.addf %289, %290 : vector<2x32xf32>
    %292 = arith.mulf %279, %291 : vector<2x32xf32>
    %293 = arith.addf %288, %292 : vector<2x32xf32>
    %294 = math.tanh %293 : vector<2x32xf32>
    %cst_43 = arith.constant 1.000000e+00 : f32
    %295 = vector.broadcast %cst_43 : f32 to vector<2x32xf32>
    %296 = arith.subf %295, %287 : vector<2x32xf32>
    %297 = arith.mulf %296, %294 : vector<2x32xf32>
    %298 = arith.mulf %287, %269 : vector<2x32xf32>
    %299 = arith.addf %297, %298 : vector<2x32xf32>
    %c7_i32 = arith.constant 7 : i32
    %300 = vector.broadcast %c7_i32 : i32 to vector<2x1xi32>
    %301 = arith.cmpi sgt, %2, %300 : vector<2x1xi32>
    %302 = vector.shape_cast %301 : vector<2x1xi1> to vector<2x1xi1>
    %303 = vector.broadcast %302 : vector<2x1xi1> to vector<2x32xi1>
    %304 = arith.select %303, %299, %269 : vector<2x32xi1>, vector<2x32xf32>
    %cst_44 = arith.constant dense<0.000000e+00> : vector<2x32xf32>
    %305 = tpu.matmul %304, %8, %cst_44 {dimension_numbers = #tpu.dot_dimension_numbers<[1], [0], [0], [1], [0, 0, 1, 1], [], []>} : vector<2x32xf32>, vector<32x32xf32>, vector<2x32xf32> -> vector<2x32xf32>
    %306 = tpu.transpose %17, [1, 0] : vector<8x32xf32> -> vector<32x8xf32>
    %cst_45 = arith.constant dense<0.000000e+00> : vector<2x8xf32>
    %307 = tpu.matmul %305, %306, %cst_45 {dimension_numbers = #tpu.dot_dimension_numbers<[1], [0], [0], [1], [0, 0, 1, 1], [], []>} : vector<2x32xf32>, vector<32x8xf32>, vector<2x8xf32> -> vector<2x8xf32>
    %308 = vector.extract_strided_slice %307 {offsets = [0, 0], sizes = [1, 4], strides = [1, 1]} : vector<2x8xf32> to vector<1x4xf32>
    %309 = vector.extract_strided_slice %307 {offsets = [1, 4], sizes = [1, 4], strides = [1, 1]} : vector<2x8xf32> to vector<1x4xf32>
    %310 = tpu.concatenate %308, %309 in 0 : vector<1x4xf32>, vector<1x4xf32> -> vector<2x4xf32>
    %c0_46 = arith.constant 0 : index
    %c0_47 = arith.constant 0 : index
    %311 = vector.load %arg5[%c0_46, %c0_47] : memref<2x4xf32, #tpu.memory_space<vmem>>, vector<2x4xf32>
    tpu.vector_store %arg5[%c0_46, %c0_47], %310 {strides = array<i32>} : memref<2x4xf32, #tpu.memory_space<vmem>>, vector<2x4xf32>,
    return
  }
}

</mosaic_0001>

<llo_original>
// kernel: listener_forward.1
$region0: #{listener_forward.1}
  #allocation0 [shape = 'u32[]', space=smem, size = 0x4, offset = 0x4, fixed_abs, tag = 'smem constant byte address 0x4 - core index']
  #allocation1 [shape = 'u32[72,128]{1,0:T(1,128)}', space=vmem, size = 0x9000, scoped, tag = 'internal scratch']
  %s0 = inlined_call_operand.vmem [shape: s32[18,1], index: 0, kind: input, shape index: {}]
  %s1 = inlined_call_operand.vmem [shape: f32[8,64], index: 1, kind: input, shape index: {}]
  %s2 = inlined_call_operand.vmem [shape: f32[48,96], index: 2, kind: input, shape index: {}]
  %s3 = inlined_call_operand.vmem [shape: f32[96,32], index: 3, kind: input, shape index: {}]
  %s4 = inlined_call_operand.vmem [shape: f32[1,64], index: 4, kind: input, shape index: {}]
  %s5 = inlined_call_operand.hbm [shape: f32[2,4], index: 5, kind: output, shape index: {}]
  %s6 = sld [smem:[#allocation0]]
  $region30: #{listener_forward.1} parent=0
    _
  %s8 = ssub.s32 1, %s6
  %s9 = scalar_select 0, %s8, %s6
  $region1: #{listener_forward.1} parent=0
    #allocation2 [shape = 'u8[1024]{0}', space=vmem, size = 0x400, scoped, tag = 'output window, operand 0, single buffered']
    #allocation3 [shape = 's32[1]{0}', space=sflag, size = 0x4, scoped, tag = 'scoped memory for listener_forward.1']
    %10 = vsyncpa [#allocation3], 0
    // Predicated region
    $region2: #{listener_forward.1} parent=1 // pred_check
      _
    $region3: #{listener_forward.1} parent=1 // pred_check_branch
      %12 = sbr.rel (0) target = $region5
    $region4: #{listener_forward.1} parent=1 // pred_region
      _
    $region5: #{listener_forward.1} parent=1 // pred_fallthru
      _
    // Predicated region
    $region6: #{listener_forward.1} parent=1 // pred_check
      _
    $region7: #{listener_forward.1} parent=1 // pred_check_branch
      %14 = sbr.rel (0) target = $region9
    $region8: #{listener_forward.1} parent=1 // pred_region
      _
    $region9: #{listener_forward.1} parent=1 // pred_fallthru
      _
    // Predicated region
    $region10: #{listener_forward.1} parent=1 // pred_check
      _
    $region11: #{listener_forward.1} parent=1 // pred_check_branch
      %16 = sbr.rel (0) target = $region13
    $region12: #{listener_forward.1} parent=1 // pred_region
      _
    $region13: #{listener_forward.1} parent=1 // pred_fallthru
      _
    // Predicated region
    $region14: #{listener_forward.1} parent=1 // pred_check
      _
    $region15: #{listener_forward.1} parent=1 // pred_check_branch
      %18 = sbr.rel (0) target = $region17
    $region16: #{listener_forward.1} parent=1 // pred_region
      _
    $region17: #{listener_forward.1} parent=1 // pred_fallthru
      _
    // Predicated region
    $region18: #{listener_forward.1} parent=1 // pred_check
      _
    $region19: #{listener_forward.1} parent=1 // pred_check_branch
      %20 = sbr.rel (0) target = $region21
    $region20: #{listener_forward.1} parent=1 // pred_region
      _
    $region21: #{listener_forward.1} parent=1 // pred_fallthru
      _
    %v21 = vld [vmem:[%s0] sm:$0xff]
    %v22 = vld [vmem:[%s0 + $0x8] sm:$0xff]
    %v23 = vld [vmem:[%s0 + $0x10] sm:$0x3]
    %v24 = vld [vmem:[%s2] sm:$0xff]
    %v25 = vld [vmem:[%s2 + $0x8] sm:$0xff]
    %v26 = vld [vmem:[%s2 + $0x10] sm:$0xff]
    %v27 = vld [vmem:[%s2 + $0x18] sm:$0xff]
    %v28 = vld [vmem:[%s2 + $0x20] sm:$0xff]
    %v29 = vld [vmem:[%s2 + $0x28] sm:$0xff]
    %v30 = vld [vmem:[%s3] sm:$0xff]
    %v31 = vld [vmem:[%s3 + $0x8] sm:$0xff]
    %v32 = vld [vmem:[%s3 + $0x10] sm:$0xff]
    %v33 = vld [vmem:[%s3 + $0x18] sm:$0xff]
    %v34 = vld [vmem:[%s3 + $0x20] sm:$0xff]
    %v35 = vld [vmem:[%s3 + $0x28] sm:$0xff]
    %v36 = vld [vmem:[%s3 + $0x30] sm:$0xff]
    %v37 = vld [vmem:[%s3 + $0x38] sm:$0xff]
    %v38 = vld [vmem:[%s3 + $0x40] sm:$0xff]
    %v39 = vld [vmem:[%s3 + $0x48] sm:$0xff]
    %v40 = vld [vmem:[%s3 + $0x50] sm:$0xff]
    %v41 = vld [vmem:[%s3 + $0x58] sm:$0xff]
    %v42 = vld [vmem:[%s4] sm:$0x1]
    %v43 = vld [vmem:[%s1] sm:$0xff]
    %v45 = vperm.slane %v42, 0
    %46 = vrot.lane.b32.xlu0 %v45, 96
    %v47 = vpop.permute.xlu0 %46
    %vm49 = vcmask 523264
    %v51 = vsel %vm49, %v43, 0
    %53 = vmatpush.msra.mxu0 0.0
    %54 = vmatpush.msra.mxu0 0.0
    %55 = vmatpush.msra.mxu0 0.0
    %56 = vmatpush.msra.mxu0 0.0
    %57 = vmatpush.msra.mxu0 0.0
    %58 = vmatpush.msra.mxu0 0.0
    %59 = vmatpush.msra.mxu0 0.0
    %60 = vmatpush.msra.mxu0 0.0
    %61 = vmatpush.msra.mxu0 %v37
    %62 = vmatpush.msra.mxu0 %v36
    %63 = vmatpush.msra.mxu0 %v35
    %64 = vmatpush.msra.mxu0 %v34
    %65 = vmatpush.msra.mxu0 %v33
    %66 = vmatpush.msra.mxu0 %v32
    %67 = vmatpush.msra.mxu0 %v31
    %68 = vmatpush.msra.mxu0 %v30
    %69 = vmatmul.f32.gmra.mxu0 %v51
    %v70 = vpop.f32.mrf.mxu0
    %v71 = vadd.f32 %v47, %v70
    %72 = vdwg.mxu0
    %v73 = vmax.f32 %v71, 0.0
    %v74 = vlaneseq
    %v75 = vand.u32 %v74, 127
    %76 = vset.pattern.permute.xlu0 0
    %77 = vperm.xlu0 %76, %v21
    %v78 = vpop.permute.xlu0 %77
    %79 = vset.pattern.permute.xlu0 0
    %80 = vperm.xlu0 %79, %v22
    %v81 = vpop.permute.xlu0 %80
    %vm82 = vcmp.eq.s32.totalorder %v78, %v75
    %vm83 = vcmp.eq.s32.totalorder %v81, %v75
    %v84 = vsel %vm82, 1, 0
    %v85 = vsel %vm83, 1, 0
    %v86 = vcvt.s32.f32 %v84
    %v87 = vcvt.s32.f32 %v85
    %vm88 = vcmask 130048
    %v90 = vsel %vm88, %v86, 0
    %v93 = vsel %vm88, %v87, 0
    %95 = vmatpush.msra.mxu0 0.0
    %96 = vmatpush.msra.mxu0 0.0
    %97 = vmatpush.msra.mxu0 0.0
    %98 = vmatpush.msra.mxu0 0.0
    %99 = vmatpush.msra.mxu0 0.0
    %100 = vmatpush.msra.mxu0 0.0
    %101 = vmatpush.msra.mxu0 0.0
    %102 = vmatpush.msra.mxu0 0.0
    %103 = vmatpush.msra.mxu0 0.0
    %104 = vmatpush.msra.mxu0 0.0
    %105 = vmatpush.msra.mxu0 0.0
    %106 = vmatpush.msra.mxu0 0.0
    %107 = vmatpush.msra.mxu0 0.0
    %108 = vmatpush.msra.mxu0 0.0
    %109 = vmatpush.msra.mxu0 %v25
    %110 = vmatpush.msra.mxu0 %v24
    %111 = vmatmul.f32.gmra.mxu0 %v90
    %v112 = vpop.f32.mrf.mxu0
    %v113 = vadd.f32 0.0, %v112
    %114 = vmatmul.f32.gmra.mxu0 %v93
    %v115 = vpop.f32.mrf.mxu0
    %v116 = vadd.f32 0.0, %v115
    %117 = vdwg.mxu0
    %vm118 = vcmask 261120
    %v120 = vsel %vm118, 0.0, 0
    %122 = vmatpush.msra.mxu0 0.0
    %123 = vmatpush.msra.mxu0 0.0
    %124 = vmatpush.msra.mxu0 0.0
    %125 = vmatpush.msra.mxu0 0.0
    %126 = vmatpush.msra.mxu0 0.0
    %127 = vmatpush.msra.mxu0 0.0
    %128 = vmatpush.msra.mxu0 0.0
    %129 = vmatpush.msra.mxu0 0.0
    %130 = vmatpush.msra.mxu0 0.0
    %131 = vmatpush.msra.mxu0 0.0
    %132 = vmatpush.msra.mxu0 0.0
    %133 = vmatpush.msra.mxu0 0.0
    %134 = vmatpush.msra.mxu0 %v29
    %135 = vmatpush.msra.mxu0 %v28
    %136 = vmatpush.msra.mxu0 %v27
    %137 = vmatpush.msra.mxu0 %v26
    %138 = vmatmul.f32.gmra.mxu0 %v120
    %v139 = vpop.f32.mrf.mxu0
    %v140 = vadd.f32 0.0, %v139
    %141 = vdwg.mxu0
    %v142 = vadd.f32 %v113, %v140
    %v143 = vxor.u32 %v142, 2147483648
    %v144 = vmul.f32 %v143, 1.442695
    %v145 = vpow.pop %v144
    %v146 = vadd.f32 %v145, 1.0
    %v147 = vrcp.pop %v146
    %v148 = vmul.f32 %v146, %v147
    %v149 = vsub.f32 1.0, %v148
    %v150 = vmul.f32 %v147, %v149
    %v151 = vadd.f32 %v147, %v150
    %vm152 = vweird.f32 %v146
    %vm153 = vweird.f32 %v147
    %vm154 = vmor %vm152, %vm153
    %v155 = vsel %vm154, %v147, %v151
    %v156 = vand.u32 2147483647, %v146
    %vm157 = vcmp.eq.f32.partialorder %v156, 8.507059e+37
    %v158 = vand.u32 %v146, 2147483648
    %v159 = vor.u32 1.1754944e-38, %v158
    %v160 = vsel %vm157, %v159, %v155
    %v161 = vmul.f32 1.0, %v160
    %162 = vrot.lane.b32.xlu0 %v45, 64
    %v163 = vpop.permute.xlu0 %162
    %v165 = vadd.f32 %v140, %v163
    %167 = vrot.lane.b32.xlu0 %v165, 64
    %v168 = vpop.permute.xlu0 %167
    %v170 = vmul.f32 %v161, %v168
    %172 = vrot.lane.b32.xlu0 %v170, 64
    %v173 = vpop.permute.xlu0 %172
    %v175 = vadd.f32 %v113, %v173
    %v176 = vtanh.pop %v175
    %v177 = vsub.f32 1.0, %v161
    %179 = vrot.lane.b32.xlu0 %v176, 96
    %v180 = vpop.permute.xlu0 %179
    %v182 = vmul.f32 %v177, %v180
    %v183 = vmul.f32 %v161, 0.0
    %v184 = vadd.f32 %v182, %v183
    %vm185 = vcmp.gt.s32.totalorder %v23, 0
    %v186 = vsel %vm185, 1, 0
    %187 = vset.pattern.permute.xlu0 0
    %188 = vperm.xlu0 %187, %v186
    %v189 = vpop.permute.xlu0 %188
    %vm190 = vcmp.eq.s32.totalorder %v189, 1
    %v191 = vsel %vm190, %v184, 0.0
    %193 = vrot.lane.b32.xlu0 %v191, 96
    %v194 = vpop.permute.xlu0 %193
    %v195 = vsel %vm118, %v194, 0
    %197 = vmatpush.msra.mxu0 0.0
    %198 = vmatpush.msra.mxu0 0.0
    %199 = vmatpush.msra.mxu0 0.0
    %200 = vmatpush.msra.mxu0 0.0
    %201 = vmatpush.msra.mxu0 0.0
    %202 = vmatpush.msra.mxu0 0.0
    %203 = vmatpush.msra.mxu0 0.0
    %204 = vmatpush.msra.mxu0 0.0
    %205 = vmatpush.msra.mxu0 0.0
    %206 = vmatpush.msra.mxu0 0.0
    %207 = vmatpush.msra.mxu0 0.0
    %208 = vmatpush.msra.mxu0 0.0
    %209 = vmatpush.msra.mxu0 %v29
    %210 = vmatpush.msra.mxu0 %v28
    %211 = vmatpush.msra.mxu0 %v27
    %212 = vmatpush.msra.mxu0 %v26
    %213 = vmatmul.f32.gmra.mxu0 %v195
    %v214 = vpop.f32.mrf.mxu0
    %v215 = vadd.f32 0.0, %v214
    %216 = vdwg.mxu0
    %v218 = vrot.slane %v215, 6
    %v220 = vadd.f32 %v113, %v218
    %v221 = vxor.u32 %v220, 2147483648
    %v222 = vmul.f32 %v221, 1.442695
    %v223 = vpow.pop %v222
    %v224 = vadd.f32 %v223, 1.0
    %v225 = vrcp.pop %v224
    %v226 = vmul.f32 %v224, %v225
    %v227 = vsub.f32 1.0, %v226
    %v228 = vmul.f32 %v225, %v227
    %v229 = vadd.f32 %v225, %v228
    %vm230 = vweird.f32 %v224
    %vm231 = vweird.f32 %v225
    %vm232 = vmor %vm230, %vm231
    %v233 = vsel %vm232, %v225, %v229
    %v234 = vand.u32 2147483647, %v224
    %vm235 = vcmp.eq.f32.partialorder %v234, 8.507059e+37
    %v236 = vand.u32 %v224, 2147483648
    %v237 = vor.u32 1.1754944e-38, %v236
    %v238 = vsel %vm235, %v237, %v233
    %v239 = vmul.f32 1.0, %v238
    %v240 = vadd.f32 %v215, %v163
    %v242 = vrot.slane %v240, 6
    %243 = vrot.lane.b32.xlu0 %v242, 64
    %v244 = vpop.permute.xlu0 %243
    %v246 = vmul.f32 %v239, %v244
    %248 = vrot.lane.b32.xlu0 %v246, 64
    %v249 = vpop.permute.xlu0 %248
    %v251 = vadd.f32 %v113, %v249
    %v252 = vtanh.pop %v251
    %v253 = vsub.f32 1.0, %v239
    %255 = vrot.lane.b32.xlu0 %v252, 96
    %v256 = vpop.permute.xlu0 %255
    %v258 = vmul.f32 %v253, %v256
    %v259 = vrot.slane %v191, 6
    %v261 = vmul.f32 %v239, %v259
    %v262 = vadd.f32 %v258, %v261
    %vm263 = vcmp.gt.s32.totalorder %v23, 1
    %v264 = vsel %vm263, 1, 0
    %265 = vset.pattern.permute.xlu0 0
    %266 = vperm.xlu0 %265, %v264
    %v267 = vpop.permute.xlu0 %266
    %vm268 = vcmp.eq.s32.totalorder %v267, 1
    %v270 = vrot.slane %v262, 2
    %271 = vrot.lane.b32.xlu0 %v270, 96
    %v272 = vpop.permute.xlu0 %271
    %v275 = vsel %vm268, %v272, %v194
    %v277 = vsel %vm118, %v275, 0
    %279 = vmatpush.msra.mxu0 0.0
    %280 = vmatpush.msra.mxu0 0.0
    %281 = vmatpush.msra.mxu0 0.0
    %282 = vmatpush.msra.mxu0 0.0
    %283 = vmatpush.msra.mxu0 0.0
    %284 = vmatpush.msra.mxu0 0.0
    %285 = vmatpush.msra.mxu0 0.0
    %286 = vmatpush.msra.mxu0 0.0
    %287 = vmatpush.msra.mxu0 0.0
    %288 = vmatpush.msra.mxu0 0.0
    %289 = vmatpush.msra.mxu0 0.0
    %290 = vmatpush.msra.mxu0 0.0
    %291 = vmatpush.msra.mxu0 %v29
    %292 = vmatpush.msra.mxu0 %v28
    %293 = vmatpush.msra.mxu0 %v27
    %294 = vmatpush.msra.mxu0 %v26
    %295 = vmatmul.f32.gmra.mxu0 %v277
    %v296 = vpop.f32.mrf.mxu0
    %v297 = vadd.f32 0.0, %v296
    %298 = vdwg.mxu0
    %v300 = vrot.slane %v297, 4
    %v302 = vadd.f32 %v113, %v300
    %v303 = vxor.u32 %v302, 2147483648
    %v304 = vmul.f32 %v303, 1.442695
    %v305 = vpow.pop %v304
    %v306 = vadd.f32 %v305, 1.0
    %v307 = vrcp.pop %v306
    %v308 = vmul.f32 %v306, %v307
    %v309 = vsub.f32 1.0, %v308
    %v310 = vmul.f32 %v307, %v309
    %v311 = vadd.f32 %v307, %v310
    %vm312 = vweird.f32 %v306
    %vm313 = vweird.f32 %v307
    %vm314 = vmor %vm312, %vm313
    %v315 = vsel %vm314, %v307, %v311
    %v316 = vand.u32 2147483647, %v306
    %vm317 = vcmp.eq.f32.partialorder %v316, 8.507059e+37
    %v318 = vand.u32 %v306, 2147483648
    %v319 = vor.u32 1.1754944e-38, %v318
    %v320 = vsel %vm317, %v319, %v315
    %v321 = vmul.f32 1.0, %v320
    %v322 = vadd.f32 %v297, %v163
    %v324 = vrot.slane %v322, 4
    %325 = vrot.lane.b32.xlu0 %v324, 64
    %v326 = vpop.permute.xlu0 %325
    %v328 = vmul.f32 %v321, %v326
    %330 = vrot.lane.b32.xlu0 %v328, 64
    %v331 = vpop.permute.xlu0 %330
    %v333 = vadd.f32 %v113, %v331
    %v334 = vtanh.pop %v333
    %v335 = vsub.f32 1.0, %v321
    %337 = vrot.lane.b32.xlu0 %v334, 96
    %v338 = vpop.permute.xlu0 %337
    %v340 = vmul.f32 %v335, %v338
    %v341 = vrot.slane %v275, 4
    %342 = vrot.lane.b32.xlu0 %v341, 32
    %v343 = vpop.permute.xlu0 %342
    %v345 = vmul.f32 %v321, %v343
    %v346 = vadd.f32 %v340, %v345
    %vm347 = vcmp.gt.s32.totalorder %v23, 2
    %v348 = vsel %vm347, 1, 0
    %349 = vset.pattern.permute.xlu0 0
    %350 = vperm.xlu0 %349, %v348
    %v351 = vpop.permute.xlu0 %350
    %vm352 = vcmp.eq.s32.totalorder %v351, 1
    %v354 = vrot.slane %v346, 4
    %355 = vrot.lane.b32.xlu0 %v354, 96
    %v356 = vpop.permute.xlu0 %355
    %v358 = vsel %vm352, %v356, %v275
    %v360 = vsel %vm118, %v358, 0
    %362 = vmatpush.msra.mxu0 0.0
    %363 = vmatpush.msra.mxu0 0.0
    %364 = vmatpush.msra.mxu0 0.0
    %365 = vmatpush.msra.mxu0 0.0
    %366 = vmatpush.msra.mxu0 0.0
    %367 = vmatpush.msra.mxu0 0.0
    %368 = vmatpush.msra.mxu0 0.0
    %369 = vmatpush.msra.mxu0 0.0
    %370 = vmatpush.msra.mxu0 0.0
    %371 = vmatpush.msra.mxu0 0.0
    %372 = vmatpush.msra.mxu0 0.0
    %373 = vmatpush.msra.mxu0 0.0
    %374 = vmatpush.msra.mxu0 %v29
    %375 = vmatpush.msra.mxu0 %v28
    %376 = vmatpush.msra.mxu0 %v27
    %377 = vmatpush.msra.mxu0 %v26
    %378 = vmatmul.f32.gmra.mxu0 %v360
    %v379 = vpop.f32.mrf.mxu0
    %v380 = vadd.f32 0.0, %v379
    %381 = vdwg.mxu0
    %v383 = vrot.slane %v380, 2
    %v385 = vadd.f32 %v113, %v383
    %v386 = vxor.u32 %v385, 2147483648
    %v387 = vmul.f32 %v386, 1.442695
    %v388 = vpow.pop %v387
    %v389 = vadd.f32 %v388, 1.0
    %v390 = vrcp.pop %v389
    %v391 = vmul.f32 %v389, %v390
    %v392 = vsub.f32 1.0, %v391
    %v393 = vmul.f32 %v390, %v392
    %v394 = vadd.f32 %v390, %v393
    %vm395 = vweird.f32 %v389
    %vm396 = vweird.f32 %v390
    %vm397 = vmor %vm395, %vm396
    %v398 = vsel %vm397, %v390, %v394
    %v399 = vand.u32 2147483647, %v389
    %vm400 = vcmp.eq.f32.partialorder %v399, 8.507059e+37
    %v401 = vand.u32 %v389, 2147483648
    %v402 = vor.u32 1.1754944e-38, %v401
    %v403 = vsel %vm400, %v402, %v398
    %v404 = vmul.f32 1.0, %v403
    %v405 = vadd.f32 %v380, %v163
    %v407 = vrot.slane %v405, 2
    %408 = vrot.lane.b32.xlu0 %v407, 64
    %v409 = vpop.permute.xlu0 %408
    %v411 = vmul.f32 %v404, %v409
    %413 = vrot.lane.b32.xlu0 %v411, 64
    %v414 = vpop.permute.xlu0 %413
    %v416 = vadd.f32 %v113, %v414
    %v417 = vtanh.pop %v416
    %v418 = vsub.f32 1.0, %v404
    %420 = vrot.lane.b32.xlu0 %v417, 96
    %v421 = vpop.permute.xlu0 %420
    %v423 = vmul.f32 %v418, %v421
    %v424 = vrot.slane %v358, 2
    %425 = vrot.lane.b32.xlu0 %v424, 32
    %v426 = vpop.permute.xlu0 %425
    %v428 = vmul.f32 %v404, %v426
    %v429 = vadd.f32 %v423, %v428
    %vm430 = vcmp.gt.s32.totalorder %v23, 3
    %v431 = vsel %vm430, 1, 0
    %432 = vset.pattern.permute.xlu0 0
    %433 = vperm.xlu0 %432, %v431
    %v434 = vpop.permute.xlu0 %433
    %vm435 = vcmp.eq.s32.totalorder %v434, 1
    %v437 = vrot.slane %v429, 6
    %438 = vrot.lane.b32.xlu0 %v437, 96
    %v439 = vpop.permute.xlu0 %438
    %v441 = vsel %vm435, %v439, %v358
    %v443 = vsel %vm118, %v441, 0
    %445 = vmatpush.msra.mxu0 0.0
    %446 = vmatpush.msra.mxu0 0.0
    %447 = vmatpush.msra.mxu0 0.0
    %448 = vmatpush.msra.mxu0 0.0
    %449 = vmatpush.msra.mxu0 0.0
    %450 = vmatpush.msra.mxu0 0.0
    %451 = vmatpush.msra.mxu0 0.0
    %452 = vmatpush.msra.mxu0 0.0
    %453 = vmatpush.msra.mxu0 0.0
    %454 = vmatpush.msra.mxu0 0.0
    %455 = vmatpush.msra.mxu0 0.0
    %456 = vmatpush.msra.mxu0 0.0
    %457 = vmatpush.msra.mxu0 %v29
    %458 = vmatpush.msra.mxu0 %v28
    %459 = vmatpush.msra.mxu0 %v27
    %460 = vmatpush.msra.mxu0 %v26
    %461 = vmatmul.f32.gmra.mxu0 %v443
    %v462 = vpop.f32.mrf.mxu0
    %v463 = vadd.f32 0.0, %v462
    %464 = vdwg.mxu0
    %v465 = vadd.f32 %v116, %v463
    %v466 = vxor.u32 %v465, 2147483648
    %v467 = vmul.f32 %v466, 1.442695
    %v468 = vpow.pop %v467
    %v469 = vadd.f32 %v468, 1.0
    %v470 = vrcp.pop %v469
    %v471 = vmul.f32 %v469, %v470
    %v472 = vsub.f32 1.0, %v471
    %v473 = vmul.f32 %v470, %v472
    %v474 = vadd.f32 %v470, %v473
    %vm475 = vweird.f32 %v469
    %vm476 = vweird.f32 %v470
    %vm477 = vmor %vm475, %vm476
    %v478 = vsel %vm477, %v470, %v474
    %v479 = vand.u32 2147483647, %v469
    %vm480 = vcmp.eq.f32.partialorder %v479, 8.507059e+37
    %v481 = vand.u32 %v469, 2147483648
    %v482 = vor.u32 1.1754944e-38, %v481
    %v483 = vsel %vm480, %v482, %v478
    %v484 = vmul.f32 1.0, %v483
    %v485 = vadd.f32 %v463, %v163
    %487 = vrot.lane.b32.xlu0 %v485, 64
    %v488 = vpop.permute.xlu0 %487
    %v490 = vmul.f32 %v484, %v488
    %492 = vrot.lane.b32.xlu0 %v490, 64
    %v493 = vpop.permute.xlu0 %492
    %v495 = vadd.f32 %v116, %v493
    %v496 = vtanh.pop %v495
    %v497 = vsub.f32 1.0, %v484
    %499 = vrot.lane.b32.xlu0 %v496, 96
    %v500 = vpop.permute.xlu0 %499
    %v502 = vmul.f32 %v497, %v500
    %503 = vrot.lane.b32.xlu0 %v441, 32
    %v504 = vpop.permute.xlu0 %503
    %v506 = vmul.f32 %v484, %v504
    %v507 = vadd.f32 %v502, %v506
    %vm508 = vcmp.gt.s32.totalorder %v23, 4
    %v509 = vsel %vm508, 1, 0
    %510 = vset.pattern.permute.xlu0 0
    %511 = vperm.xlu0 %510, %v509
    %v512 = vpop.permute.xlu0 %511
    %vm513 = vcmp.eq.s32.totalorder %v512, 1
    %v514 = vsel %vm513, %v507, %v504
    %516 = vrot.lane.b32.xlu0 %v514, 96
    %v517 = vpop.permute.xlu0 %516
    %v518 = vsel %vm118, %v517, 0
    %520 = vmatpush.msra.mxu0 0.0
    %521 = vmatpush.msra.mxu0 0.0
    %522 = vmatpush.msra.mxu0 0.0
    %523 = vmatpush.msra.mxu0 0.0
    %524 = vmatpush.msra.mxu0 0.0
    %525 = vmatpush.msra.mxu0 0.0
    %526 = vmatpush.msra.mxu0 0.0
    %527 = vmatpush.msra.mxu0 0.0
    %528 = vmatpush.msra.mxu0 0.0
    %529 = vmatpush.msra.mxu0 0.0
    %530 = vmatpush.msra.mxu0 0.0
    %531 = vmatpush.msra.mxu0 0.0
    %532 = vmatpush.msra.mxu0 %v29
    %533 = vmatpush.msra.mxu0 %v28
    %534 = vmatpush.msra.mxu0 %v27
    %535 = vmatpush.msra.mxu0 %v26
    %536 = vmatmul.f32.gmra.mxu0 %v518
    %v537 = vpop.f32.mrf.mxu0
    %v538 = vadd.f32 0.0, %v537
    %539 = vdwg.mxu0
    %v541 = vrot.slane %v538, 6
    %v543 = vadd.f32 %v116, %v541
    %v544 = vxor.u32 %v543, 2147483648
    %v545 = vmul.f32 %v544, 1.442695
    %v546 = vpow.pop %v545
    %v547 = vadd.f32 %v546, 1.0
    %v548 = vrcp.pop %v547
    %v549 = vmul.f32 %v547, %v548
    %v550 = vsub.f32 1.0, %v549
    %v551 = vmul.f32 %v548, %v550
    %v552 = vadd.f32 %v548, %v551
    %vm553 = vweird.f32 %v547
    %vm554 = vweird.f32 %v548
    %vm555 = vmor %vm553, %vm554
    %v556 = vsel %vm555, %v548, %v552
    %v557 = vand.u32 2147483647, %v547
    %vm558 = vcmp.eq.f32.partialorder %v557, 8.507059e+37
    %v559 = vand.u32 %v547, 2147483648
    %v560 = vor.u32 1.1754944e-38, %v559
    %v561 = vsel %vm558, %v560, %v556
    %v562 = vmul.f32 1.0, %v561
    %v563 = vadd.f32 %v538, %v163
    %v565 = vrot.slane %v563, 6
    %566 = vrot.lane.b32.xlu0 %v565, 64
    %v567 = vpop.permute.xlu0 %566
    %v569 = vmul.f32 %v562, %v567
    %571 = vrot.lane.b32.xlu0 %v569, 64
    %v572 = vpop.permute.xlu0 %571
    %v574 = vadd.f32 %v116, %v572
    %v575 = vtanh.pop %v574
    %v576 = vsub.f32 1.0, %v562
    %578 = vrot.lane.b32.xlu0 %v575, 96
    %v579 = vpop.permute.xlu0 %578
    %v581 = vmul.f32 %v576, %v579
    %v582 = vrot.slane %v514, 6
    %v584 = vmul.f32 %v562, %v582
    %v585 = vadd.f32 %v581, %v584
    %vm586 = vcmp.gt.s32.totalorder %v23, 5
    %v587 = vsel %vm586, 1, 0
    %588 = vset.pattern.permute.xlu0 0
    %589 = vperm.xlu0 %588, %v587
    %v590 = vpop.permute.xlu0 %589
    %vm591 = vcmp.eq.s32.totalorder %v590, 1
    %v593 = vrot.slane %v585, 2
    %594 = vrot.lane.b32.xlu0 %v593, 96
    %v595 = vpop.permute.xlu0 %594
    %v598 = vsel %vm591, %v595, %v517
    %v600 = vsel %vm118, %v598, 0
    %602 = vmatpush.msra.mxu0 0.0
    %603 = vmatpush.msra.mxu0 0.0
    %604 = vmatpush.msra.mxu0 0.0
    %605 = vmatpush.msra.mxu0 0.0
    %606 = vmatpush.msra.mxu0 0.0
    %607 = vmatpush.msra.mxu0 0.0
    %608 = vmatpush.msra.mxu0 0.0
    %609 = vmatpush.msra.mxu0 0.0
    %610 = vmatpush.msra.mxu0 0.0
    %611 = vmatpush.msra.mxu0 0.0
    %612 = vmatpush.msra.mxu0 0.0
    %613 = vmatpush.msra.mxu0 0.0
    %614 = vmatpush.msra.mxu0 %v29
    %615 = vmatpush.msra.mxu0 %v28
    %616 = vmatpush.msra.mxu0 %v27
    %617 = vmatpush.msra.mxu0 %v26
    %618 = vmatmul.f32.gmra.mxu0 %v600
    %v619 = vpop.f32.mrf.mxu0
    %v620 = vadd.f32 0.0, %v619
    %621 = vdwg.mxu0
    %v623 = vrot.slane %v620, 4
    %v625 = vadd.f32 %v116, %v623
    %v626 = vxor.u32 %v625, 2147483648
    %v627 = vmul.f32 %v626, 1.442695
    %v628 = vpow.pop %v627
    %v629 = vadd.f32 %v628, 1.0
    %v630 = vrcp.pop %v629
    %v631 = vmul.f32 %v629, %v630
    %v632 = vsub.f32 1.0, %v631
    %v633 = vmul.f32 %v630, %v632
    %v634 = vadd.f32 %v630, %v633
    %vm635 = vweird.f32 %v629
    %vm636 = vweird.f32 %v630
    %vm637 = vmor %vm635, %vm636
    %v638 = vsel %vm637, %v630, %v634
    %v639 = vand.u32 2147483647, %v629
    %vm640 = vcmp.eq.f32.partialorder %v639, 8.507059e+37
    %v641 = vand.u32 %v629, 2147483648
    %v642 = vor.u32 1.1754944e-38, %v641
    %v643 = vsel %vm640, %v642, %v638
    %v644 = vmul.f32 1.0, %v643
    %v645 = vadd.f32 %v620, %v163
    %v647 = vrot.slane %v645, 4
    %648 = vrot.lane.b32.xlu0 %v647, 64
    %v649 = vpop.permute.xlu0 %648
    %v651 = vmul.f32 %v644, %v649
    %653 = vrot.lane.b32.xlu0 %v651, 64
    %v654 = vpop.permute.xlu0 %653
    %v656 = vadd.f32 %v116, %v654
    %v657 = vtanh.pop %v656
    %v658 = vsub.f32 1.0, %v644
    %660 = vrot.lane.b32.xlu0 %v657, 96
    %v661 = vpop.permute.xlu0 %660
    %v663 = vmul.f32 %v658, %v661
    %v664 = vrot.slane %v598, 4
    %665 = vrot.lane.b32.xlu0 %v664, 32
    %v666 = vpop.permute.xlu0 %665
    %v668 = vmul.f32 %v644, %v666
    %v669 = vadd.f32 %v663, %v668
    %vm670 = vcmp.gt.s32.totalorder %v23, 6
    %v671 = vsel %vm670, 1, 0
    %672 = vset.pattern.permute.xlu0 0
    %673 = vperm.xlu0 %672, %v671
    %v674 = vpop.permute.xlu0 %673
    %vm675 = vcmp.eq.s32.totalorder %v674, 1
    %v677 = vrot.slane %v669, 4
    %678 = vrot.lane.b32.xlu0 %v677, 96
    %v679 = vpop.permute.xlu0 %678
    %v681 = vsel %vm675, %v679, %v598
    %v683 = vsel %vm118, %v681, 0
    %685 = vmatpush.msra.mxu0 0.0
    %686 = vmatpush.msra.mxu0 0.0
    %687 = vmatpush.msra.mxu0 0.0
    %688 = vmatpush.msra.mxu0 0.0
    %689 = vmatpush.msra.mxu0 0.0
    %690 = vmatpush.msra.mxu0 0.0
    %691 = vmatpush.msra.mxu0 0.0
    %692 = vmatpush.msra.mxu0 0.0
    %693 = vmatpush.msra.mxu0 0.0
    %694 = vmatpush.msra.mxu0 0.0
    %695 = vmatpush.msra.mxu0 0.0
    %696 = vmatpush.msra.mxu0 0.0
    %697 = vmatpush.msra.mxu0 %v29
    %698 = vmatpush.msra.mxu0 %v28
    %699 = vmatpush.msra.mxu0 %v27
    %700 = vmatpush.msra.mxu0 %v26
    %701 = vmatmul.f32.gmra.mxu0 %v683
    %v702 = vpop.f32.mrf.mxu0
    %v703 = vadd.f32 0.0, %v702
    %704 = vdwg.mxu0
    %v706 = vrot.slane %v703, 2
    %v708 = vadd.f32 %v116, %v706
    %v709 = vxor.u32 %v708, 2147483648
    %v710 = vmul.f32 %v709, 1.442695
    %v711 = vpow.pop %v710
    %v712 = vadd.f32 %v711, 1.0
    %v713 = vrcp.pop %v712
    %v714 = vmul.f32 %v712, %v713
    %v715 = vsub.f32 1.0, %v714
    %v716 = vmul.f32 %v713, %v715
    %v717 = vadd.f32 %v713, %v716
    %vm718 = vweird.f32 %v712
    %vm719 = vweird.f32 %v713
    %vm720 = vmor %vm718, %vm719
    %v721 = vsel %vm720, %v713, %v717
    %v722 = vand.u32 2147483647, %v712
    %vm723 = vcmp.eq.f32.partialorder %v722, 8.507059e+37
    %v724 = vand.u32 %v712, 2147483648
    %v725 = vor.u32 1.1754944e-38, %v724
    %v726 = vsel %vm723, %v725, %v721
    %v727 = vmul.f32 1.0, %v726
    %v728 = vadd.f32 %v703, %v163
    %v730 = vrot.slane %v728, 2
    %731 = vrot.lane.b32.xlu0 %v730, 64
    %v732 = vpop.permute.xlu0 %731
    %v734 = vmul.f32 %v727, %v732
    %736 = vrot.lane.b32.xlu0 %v734, 64
    %v737 = vpop.permute.xlu0 %736
    %v739 = vadd.f32 %v116, %v737
    %v740 = vtanh.pop %v739
    %v741 = vsub.f32 1.0, %v727
    %743 = vrot.lane.b32.xlu0 %v740, 96
    %v744 = vpop.permute.xlu0 %743
    %v746 = vmul.f32 %v741, %v744
    %v747 = vrot.slane %v681, 2
    %748 = vrot.lane.b32.xlu0 %v747, 32
    %v749 = vpop.permute.xlu0 %748
    %v751 = vmul.f32 %v727, %v749
    %v752 = vadd.f32 %v746, %v751
    %vm753 = vcmp.gt.s32.totalorder %v23, 7
    %v754 = vsel %vm753, 1, 0
    %755 = vset.pattern.permute.xlu0 0
    %756 = vperm.xlu0 %755, %v754
    %v757 = vpop.permute.xlu0 %756
    %vm758 = vcmp.eq.s32.totalorder %v757, 1
    %v760 = vrot.slane %v752, 6
    %761 = vrot.lane.b32.xlu0 %v760, 96
    %v762 = vpop.permute.xlu0 %761
    %v764 = vsel %vm758, %v762, %v681
    %v766 = vsel %vm118, %v764, 0
    %768 = vmatpush.msra.mxu0 0.0
    %769 = vmatpush.msra.mxu0 0.0
    %770 = vmatpush.msra.mxu0 0.0
    %771 = vmatpush.msra.mxu0 0.0
    %772 = vmatpush.msra.mxu0 0.0
    %773 = vmatpush.msra.mxu0 0.0
    %774 = vmatpush.msra.mxu0 0.0
    %775 = vmatpush.msra.mxu0 0.0
    %776 = vmatpush.msra.mxu0 0.0
    %777 = vmatpush.msra.mxu0 0.0
    %778 = vmatpush.msra.mxu0 0.0
    %779 = vmatpush.msra.mxu0 0.0
    %780 = vmatpush.msra.mxu0 %v41
    %781 = vmatpush.msra.mxu0 %v40
    %782 = vmatpush.msra.mxu0 %v39
    %783 = vmatpush.msra.mxu0 %v38
    %784 = vmatmul.f32.gmra.mxu0 %v766
    %v785 = vpop.f32.mrf.mxu0
    %v786 = vadd.f32 0.0, %v785
    %787 = vdwg.mxu0
    %v789 = vsel %vm118, %v786, 0
    %v792 = vsel %vm118, %v73, 0
    %794 = vmatpush.xpose.msra.mxu0 0.0
    %795 = vmatpush.xpose.msra.mxu0 0.0
    %796 = vmatpush.xpose.msra.mxu0 0.0
    %797 = vmatpush.xpose.msra.mxu0 0.0
    %798 = vmatpush.xpose.msra.mxu0 0.0
    %799 = vmatpush.xpose.msra.mxu0 0.0
    %800 = vmatpush.xpose.msra.mxu0 0.0
    %801 = vmatpush.xpose.msra.mxu0 0.0
    %802 = vmatpush.xpose.msra.mxu0 0.0
    %803 = vmatpush.xpose.msra.mxu0 0.0
    %804 = vmatpush.xpose.msra.mxu0 0.0
    %805 = vmatpush.xpose.msra.mxu0 0.0
    %806 = vmatpush.xpose.msra.mxu0 0.0
    %807 = vmatpush.xpose.msra.mxu0 0.0
    %808 = vmatpush.xpose.msra.mxu0 0.0
    %809 = vmatpush.xpose.msra.mxu0 %v792
    %810 = vmatmul.f32.gmra.mxu0 %v789
    %v811 = vpop.f32.mrf.mxu0
    %v812 = vadd.f32 0.0, %v811
    %813 = vdwg.mxu0
    %815 = vrot.lane.b32.xlu0 %v812, 124
    %v816 = vpop.permute.xlu0 %815
    %vm818 = vcmask 1040384
    %v819 = vsel %vm818, %v812, %v816
    %vm820 = vcmask 25600
    %821 = vst.msk [vmem:[#allocation2] sm:$0x3] %vm820, %v819
    // Predicated region
    $region22: #{listener_forward.1} parent=1 // pred_check
      _
    $region23: #{listener_forward.1} parent=1 // pred_check_branch
      %823 = sbr.rel (0) target = $region25
    $region24: #{listener_forward.1} parent=1 // pred_region
      %825 = vsyncadd [#allocation3], 0
      %s827 = sshll.u32 [#allocation2], 4
      %s828 = int_to_ptr.vmem [resolvable:$true] %s827
      %s829 = sshll.u32 %s5, 4
      %s830 = int_to_ptr.hbm [resolvable:$true] %s829
      %832 = dma.vmem_to_hbm [thread:$0]  %s828, 32, %s830, [#allocation3]
    $region25: #{listener_forward.1} parent=1 // pred_fallthru
      _
    // Predicated region
    $region26: #{listener_forward.1} parent=1 // pred_check
      _
    $region27: #{listener_forward.1} parent=1 // pred_check_branch
      %834 = sbr.rel (0) target = $region29
    $region28: #{listener_forward.1} parent=1 // pred_region
      %836 = dma.done [#allocation3], 32
    $region29: #{listener_forward.1} parent=1 // pred_fallthru
      _
    %837 = vsyncpa [#allocation3], 1

</llo_original>
